<compile_context>
chip_gen: v5e
topology: v5e:2x2
jax: 0.10.0
libtpu: 0.0.40
codegen_flags: <defaults>
</compile_context>

<pallas_src>
import functools

import jax
import jax.numpy as jnp
from jax import lax
from jax.experimental import pallas as pl
from jax.experimental.pallas import tpu as pltpu


def _round_up(x: int, m: int) -> int:
    return ((x + m - 1) // m) * m


def _largest_tile(dim_p: int, unit: int, cap: int) -> int:
    """Largest multiple of `unit` that divides `dim_p` and is <= cap (and <= dim_p)."""
    best = unit
    t = unit
    limit = min(dim_p, cap)
    while t <= limit:
        if dim_p % t == 0:
            best = t
        t += unit
    return best


def _linear_kernel(x_ref, w_ref, b_ref, o_ref):
    # x_ref: (tm, tk) activation tile
    # w_ref: (tn, tk) weight tile, PyTorch (out, in) layout
    # b_ref: (1,  tn) bias tile for this output-column block
    # o_ref: (tm, tn) f32 output tile, resident across the k grid axis
    k = pl.program_id(2)

    @pl.when(k == 0)
    def _():
        # Initialize the resident output block with the bias (added exactly once).
        o_ref[...] = jnp.broadcast_to(b_ref[...].astype(jnp.float32), o_ref.shape)

    # Contract x's D axis (1) against w's D axis (1): x @ w.T without a transpose.
    o_ref[...] += lax.dot_general(
        x_ref[...],
        w_ref[...],
        dimension_numbers=(((1,), (1,)), ((), ())),
        preferred_element_type=jnp.float32,
    )


@functools.partial(
    jax.jit, static_argnames=("tm_max", "tn_max", "tk_max", "compute_dtype")
)
def cls_head_forward(feature, weight, bias, *, tm_max=512, tn_max=1024, tk_max=2048,
                     compute_dtype=None):
    """Equivalent of PyTorch nn.Linear(input_dim, output_dim).forward.

    feature: (N, input_dim)  float32
    weight:  (output_dim, input_dim) float32 (PyTorch layout, NOT transposed here)
    bias:    (output_dim,)   float32
    compute_dtype: optional (e.g. jnp.bfloat16) MXU input dtype; accumulation stays f32.
    returns: (N, output_dim) with feature's dtype
    """
    n, d = feature.shape
    c, d2 = weight.shape
    assert d == d2, "input_dim mismatch"
    assert bias.shape == (c,)

    # Hardware-required alignment only (8 sublanes, 128 lanes).
    n_p = _round_up(n, 8)
    c_p = _round_up(c, 128)
    d_p = _round_up(d, 128)

    # Tiles divide the padded dims exactly -> zero tile-padding waste.
    tm = _largest_tile(n_p, 8, tm_max)
    tn = _largest_tile(c_p, 128, tn_max)
    tk = _largest_tile(d_p, 128, tk_max)

    # v7x megacore: keep at least one "parallel" grid dim with extent >= 2 when possible.
    if (n_p // tm) < 2 and (c_p // tn) < 2 and c_p >= 256:
        tn = _largest_tile(c_p, 128, max(128, c_p // 2))

    x = feature
    w = weight
    if compute_dtype is not None:
        x = x.astype(compute_dtype)
        w = w.astype(compute_dtype)

    # Pad only when strictly needed (static condition under jit); aligned dims
    # (the common case for real hidden sizes) incur no extra HBM copy at all.
    if (n_p, d_p) != (n, d):
        x = jnp.pad(x, ((0, n_p - n), (0, d_p - d)))
    if (c_p, d_p) != (c, d):
        w = jnp.pad(w, ((0, c_p - c), (0, d_p - d)))
    b2d = (jnp.pad(bias, (0, c_p - c)) if c_p != c else bias).reshape(1, c_p)

    grid = (n_p // tm, c_p // tn, d_p // tk)

    out = pl.pallas_call(
        _linear_kernel,
        out_shape=jax.ShapeDtypeStruct((n_p, c_p), jnp.float32),
        grid_spec=pltpu.PrefetchScalarGridSpec(
            num_scalar_prefetch=0,
            grid=grid,
            in_specs=[
                pl.BlockSpec((tm, tk), lambda i, j, k: (i, k)),   # x
                pl.BlockSpec((tn, tk), lambda i, j, k: (j, k)),   # w (C, D)
                pl.BlockSpec((1, tn), lambda i, j, k: (0, j)),    # bias
            ],
            out_specs=pl.BlockSpec((tm, tn), lambda i, j, k: (i, j)),
        ),
        compiler_params=pltpu.CompilerParams(
            dimension_semantics=("parallel", "parallel", "arbitrary"),
            # Max double-buffered footprint with the tile caps above is ~28 MiB
            # (f32): safe on v7x's 64 MiB/TC, and explicitly above v5e's 16 MiB
            # scoped default so large tiles are actually usable there.
            vmem_limit_bytes=48 * 1024 * 1024,
        ),
        cost_estimate=pl.CostEstimate(
            flops=2 * n_p * c_p * d_p,
            transcendentals=0,
            bytes_accessed=(x.dtype.itemsize * n_p * d_p
                            + w.dtype.itemsize * c_p * d_p
                            + 4 * (n_p * c_p + c_p)),
        ),
    )(x, w, b2d)

    return out[:n, :c].astype(feature.dtype)


if __name__ == "__main__":
    key = jax.random.PRNGKey(0)
    ks = jax.random.split(key, 9)

    # 1) Small shapes consistent with cls_head(input_dim=32, output_dim=16).
    batch, input_dim, output_dim = 8, 32, 16
    bound = 1.0 / jnp.sqrt(jnp.float32(input_dim))
    feature = jax.random.normal(ks[0], (batch, input_dim), dtype=jnp.float32)
    weight = jax.random.uniform(ks[1], (output_dim, input_dim),
                                minval=-bound, maxval=bound, dtype=jnp.float32)
    bias = jax.random.uniform(ks[2], (output_dim,),
                              minval=-bound, maxval=bound, dtype=jnp.float32)

    out = jax.block_until_ready(cls_head_forward(feature, weight, bias))
    ref = feature @ weight.T + bias
    assert out.shape == (batch, output_dim)
    assert jnp.allclose(out, ref, atol=1e-5, rtol=1e-5), "mismatch vs reference (small)"

    # 2) Multi-tile output grid with a ragged C (exercises conditional padding +
    #    megacore tn capping: grid becomes (1, 3, 1)).
    n2, d2, c2 = 256, 384, 320
    bound2 = 1.0 / jnp.sqrt(jnp.float32(d2))
    x2 = jax.random.normal(ks[3], (n2, d2), dtype=jnp.float32)
    w2 = jax.random.uniform(ks[4], (c2, d2), minval=-bound2, maxval=bound2,
                            dtype=jnp.float32)
    b2 = jax.random.uniform(ks[5], (c2,), minval=-bound2, maxval=bound2,
                            dtype=jnp.float32)
    out2 = jax.block_until_ready(cls_head_forward(x2, w2, b2))
    ref2 = x2 @ w2.T + b2
    assert out2.shape == (n2, c2)
    assert jnp.allclose(out2, ref2, atol=1e-4, rtol=1e-4), "mismatch vs reference (ragged C)"

    # 3) Fully aligned shapes (zero padding path) with a multi-step K reduction
    #    accumulating directly into the resident output block.
    n3, d3, c3 = 64, 1024, 256
    bound3 = 1.0 / jnp.sqrt(jnp.float32(d3))
    x3 = jax.random.normal(ks[6], (n3, d3), dtype=jnp.float32)
    w3 = jax.random.uniform(ks[7], (c3, d3), minval=-bound3, maxval=bound3,
                            dtype=jnp.float32)
    b3 = jax.random.uniform(ks[8], (c3,), minval=-bound3, maxval=bound3,
                            dtype=jnp.float32)
    out3 = jax.block_until_ready(cls_head_forward(x3, w3, b3, tk_max=256))
    ref3 = x3 @ w3.T + b3
    assert out3.shape == (n3, c3)
    assert jnp.allclose(out3, ref3, atol=2e-3, rtol=2e-3), "mismatch vs reference (K-tiled)"

    # TODO(synk): grouped_parameters / obtain_optim are optimizer plumbing, not forward
    # compute — no Pallas equivalent needed.
    print("KERNEL_OK")
</pallas_src>

<mosaic_0001>
module attributes {stable_mosaic.version = 11 : i64} {
  func.func @_linear_kernel(%arg0: i32, %arg1: i32, %arg2: i32, %arg3: memref<8x128xf32, #tpu.memory_space<vmem>>, %arg4: memref<128x128xf32, #tpu.memory_space<vmem>>, %arg5: memref<1x128xf32, #tpu.memory_space<vmem>>, %arg6: memref<8x128xf32, #tpu.memory_space<vmem>>) attributes {dimension_semantics = [#tpu.dimension_semantics<parallel>, #tpu.dimension_semantics<parallel>, #tpu.dimension_semantics<arbitrary>], iteration_bounds = array<i64: 1, 1, 1>, scalar_prefetch = 0 : i64, scratch_operands = 0 : i64, tpu.core_type = #tpu.core_type<tc>, window_params = [{transform_indices = @transform_0, window_bounds = array<i64: 8, 128>}, {transform_indices = @transform_1, window_bounds = array<i64: 128, 128>}, {transform_indices = @transform_2, window_bounds = array<i64: 1, 128>}, {transform_indices = @transform_3, window_bounds = array<i64: 8, 128>}]} {
    %c0_i32 = arith.constant 0 : i32
    %0 = arith.cmpi eq, %arg2, %c0_i32 : i32
    %1 = arith.extui %0 : i1 to i32
    %c0_i32_0 = arith.constant 0 : i32
    %2 = arith.cmpi ne, %1, %c0_i32_0 : i32
    scf.if %2 {
      %c0_8 = arith.constant 0 : index
      %c0_9 = arith.constant 0 : index
      %9 = vector.load %arg5[%c0_8, %c0_9] : memref<1x128xf32, #tpu.memory_space<vmem>>, vector<1x128xf32>
      %10 = vector.shape_cast %9 : vector<1x128xf32> to vector<1x128xf32>
      %11 = vector.broadcast %10 : vector<1x128xf32> to vector<8x128xf32>
      %c0_10 = arith.constant 0 : index
      %c0_11 = arith.constant 0 : index
      %12 = vector.load %arg6[%c0_10, %c0_11] : memref<8x128xf32, #tpu.memory_space<vmem>>, vector<8x128xf32>
      tpu.vector_store %arg6[%c0_10, %c0_11], %11 {strides = array<i32>} : memref<8x128xf32, #tpu.memory_space<vmem>>, vector<8x128xf32>,
    } else {
    }
    %c0 = arith.constant 0 : index
    %c0_1 = arith.constant 0 : index
    %3 = vector.load %arg6[%c0, %c0_1] : memref<8x128xf32, #tpu.memory_space<vmem>>, vector<8x128xf32>
    %c0_2 = arith.constant 0 : index
    %c0_3 = arith.constant 0 : index
    %4 = vector.load %arg3[%c0_2, %c0_3] : memref<8x128xf32, #tpu.memory_space<vmem>>, vector<8x128xf32>
    %c0_4 = arith.constant 0 : index
    %c0_5 = arith.constant 0 : index
    %5 = vector.load %arg4[%c0_4, %c0_5] : memref<128x128xf32, #tpu.memory_space<vmem>>, vector<128x128xf32>
    %cst = arith.constant dense<0.000000e+00> : vector<8x128xf32>
    %6 = tpu.matmul %4, %5, %cst {dimension_numbers = #tpu.dot_dimension_numbers<[1], [1], [0], [0], [0, 0, 1, 0], [], []>} : vector<8x128xf32>, vector<128x128xf32>, vector<8x128xf32> -> vector<8x128xf32>
    %7 = arith.addf %3, %6 : vector<8x128xf32>
    %c0_6 = arith.constant 0 : index
    %c0_7 = arith.constant 0 : index
    %8 = vector.load %arg6[%c0_6, %c0_7] : memref<8x128xf32, #tpu.memory_space<vmem>>, vector<8x128xf32>
    tpu.vector_store %arg6[%c0_6, %c0_7], %7 {strides = array<i32>} : memref<8x128xf32, #tpu.memory_space<vmem>>, vector<8x128xf32>,
    return
  }
  func.func @transform_0(%arg0: i32, %arg1: i32, %arg2: i32) -> (i32, i32) {
    %c0_i32 = arith.constant 0 : i32
    return %arg0, %arg2 : i32, i32
  }
  func.func @transform_1(%arg0: i32, %arg1: i32, %arg2: i32) -> (i32, i32) {
    %c0_i32 = arith.constant 0 : i32
    return %arg1, %arg2 : i32, i32
  }
  func.func @transform_2(%arg0: i32, %arg1: i32, %arg2: i32) -> (i32, i32) {
    %c0_i32 = arith.constant 0 : i32
    %c0_i32_0 = arith.constant 0 : i32
    return %c0_i32, %arg1 : i32, i32
  }
  func.func @transform_3(%arg0: i32, %arg1: i32, %arg2: i32) -> (i32, i32) {
    %c0_i32 = arith.constant 0 : i32
    return %arg0, %arg1 : i32, i32
  }
}

</mosaic_0001>

<llo_original>
// kernel: cls_head_forward.1
$region0: #{cls_head_forward.1}
  #allocation0 [shape = 'u32[]', space=smem, size = 0x4, offset = 0x4, fixed_abs, tag = 'smem constant byte address 0x4 - core index']
  #allocation1 [shape = 'u32[72,128]{1,0:T(1,128)}', space=vmem, size = 0x9000, scoped, tag = 'internal scratch']
  %s0 = inlined_call_operand.vmem [shape: f32[8,128], index: 0, kind: input, shape index: {}]
  %s1 = inlined_call_operand.vmem [shape: f32[128,128], index: 1, kind: input, shape index: {}]
  %s2 = inlined_call_operand.vmem [shape: f32[1,128], index: 2, kind: input, shape index: {}]
  %s3 = inlined_call_operand.hbm [shape: f32[8,128], index: 3, kind: output, shape index: {}]
  %s4 = sld [smem:[#allocation0]]
  $region26: #{cls_head_forward.1} parent=0
    _
  %s6 = ssub.s32 1, %s4
  %s7 = scalar_select 0, %s6, %s4
  $region1: #{cls_head_forward.1} parent=0
    #allocation2 [shape = 'u8[4096]{0}', space=vmem, size = 0x1000, scoped, tag = 'output window, operand 0, single buffered']
    #allocation3 [shape = 's32[1]{0}', space=sflag, size = 0x4, scoped, tag = 'scoped memory for cls_head_forward.1']
    %8 = vsyncpa [#allocation3], 0
    // Predicated region
    $region2: #{cls_head_forward.1} parent=1 // pred_check
      _
    $region3: #{cls_head_forward.1} parent=1 // pred_check_branch
      %10 = sbr.rel (0) target = $region5
    $region4: #{cls_head_forward.1} parent=1 // pred_region
      _
    $region5: #{cls_head_forward.1} parent=1 // pred_fallthru
      _
    // Predicated region
    $region6: #{cls_head_forward.1} parent=1 // pred_check
      _
    $region7: #{cls_head_forward.1} parent=1 // pred_check_branch
      %12 = sbr.rel (0) target = $region9
    $region8: #{cls_head_forward.1} parent=1 // pred_region
      _
    $region9: #{cls_head_forward.1} parent=1 // pred_fallthru
      _
    // Predicated region
    $region10: #{cls_head_forward.1} parent=1 // pred_check
      _
    $region11: #{cls_head_forward.1} parent=1 // pred_check_branch
      %14 = sbr.rel (0) target = $region13
    $region12: #{cls_head_forward.1} parent=1 // pred_region
      _
    $region13: #{cls_head_forward.1} parent=1 // pred_fallthru
      _
    %p15 = scmp.eq.s32.totalorder 0, 0
    // Predicated region
    $region14: #{cls_head_forward.1} parent=1 // pred_check
      %p16 = pneg %p15
    $region15: #{cls_head_forward.1} parent=1 // pred_check_branch
      %18 = sbr.rel (%p16) target = $region17
    $region16: #{cls_head_forward.1} parent=1 // pred_region
      %v19 = vld [vmem:[%s2] sm:$0x1]
      %v21 = vperm.slane %v19, 0
      %23 = vst [vmem:[#allocation2] sm:$0xff] %v21
    $region17: #{cls_head_forward.1} parent=1 // pred_fallthru
      _
    %v24 = vld [vmem:[#allocation2] sm:$0xff]
    %v25 = vld [vmem:[%s0] sm:$0xff]
    %v26 = vld [vmem:[%s1] sm:$0xff]
    %v27 = vld [vmem:[%s1 + $0x8] sm:$0xff]
    %v28 = vld [vmem:[%s1 + $0x10] sm:$0xff]
    %v29 = vld [vmem:[%s1 + $0x18] sm:$0xff]
    %v30 = vld [vmem:[%s1 + $0x20] sm:$0xff]
    %v31 = vld [vmem:[%s1 + $0x28] sm:$0xff]
    %v32 = vld [vmem:[%s1 + $0x30] sm:$0xff]
    %v33 = vld [vmem:[%s1 + $0x38] sm:$0xff]
    %v34 = vld [vmem:[%s1 + $0x40] sm:$0xff]
    %v35 = vld [vmem:[%s1 + $0x48] sm:$0xff]
    %v36 = vld [vmem:[%s1 + $0x50] sm:$0xff]
    %v37 = vld [vmem:[%s1 + $0x58] sm:$0xff]
    %v38 = vld [vmem:[%s1 + $0x60] sm:$0xff]
    %v39 = vld [vmem:[%s1 + $0x68] sm:$0xff]
    %v40 = vld [vmem:[%s1 + $0x70] sm:$0xff]
    %v41 = vld [vmem:[%s1 + $0x78] sm:$0xff]
    %42 = vmatpush.xpose.msra.mxu0 %v41
    %43 = vmatpush.xpose.msra.mxu0 %v40
    %44 = vmatpush.xpose.msra.mxu0 %v39
    %45 = vmatpush.xpose.msra.mxu0 %v38
    %46 = vmatpush.xpose.msra.mxu0 %v37
    %47 = vmatpush.xpose.msra.mxu0 %v36
    %48 = vmatpush.xpose.msra.mxu0 %v35
    %49 = vmatpush.xpose.msra.mxu0 %v34
    %50 = vmatpush.xpose.msra.mxu0 %v33
    %51 = vmatpush.xpose.msra.mxu0 %v32
    %52 = vmatpush.xpose.msra.mxu0 %v31
    %53 = vmatpush.xpose.msra.mxu0 %v30
    %54 = vmatpush.xpose.msra.mxu0 %v29
    %55 = vmatpush.xpose.msra.mxu0 %v28
    %56 = vmatpush.xpose.msra.mxu0 %v27
    %57 = vmatpush.xpose.msra.mxu0 %v26
    %58 = vmatmul.f32.gmra.mxu0 %v25
    %v59 = vpop.f32.mrf.mxu0
    %v60 = vadd.f32 0.0, %v59
    %61 = vdwg.mxu0
    %v62 = vadd.f32 %v24, %v60
    %63 = vst [vmem:[#allocation2] sm:$0xff] %v62
    // Predicated region
    $region18: #{cls_head_forward.1} parent=1 // pred_check
      _
    $region19: #{cls_head_forward.1} parent=1 // pred_check_branch
      %65 = sbr.rel (0) target = $region21
    $region20: #{cls_head_forward.1} parent=1 // pred_region
      %67 = vsyncadd [#allocation3], 0
      %s69 = sshll.u32 [#allocation2], 4
      %s70 = int_to_ptr.vmem [resolvable:$true] %s69
      %s71 = sshll.u32 %s3, 4
      %s72 = int_to_ptr.hbm [resolvable:$true] %s71
      %74 = dma.vmem_to_hbm [thread:$0]  %s70, 128, %s72, [#allocation3]
    $region21: #{cls_head_forward.1} parent=1 // pred_fallthru
      _
    // Predicated region
    $region22: #{cls_head_forward.1} parent=1 // pred_check
      _
    $region23: #{cls_head_forward.1} parent=1 // pred_check_branch
      %76 = sbr.rel (0) target = $region25
    $region24: #{cls_head_forward.1} parent=1 // pred_region
      %78 = dma.done [#allocation3], 128
    $region25: #{cls_head_forward.1} parent=1 // pred_fallthru
      _
    %79 = vsyncpa [#allocation3], 1

</llo_original>
